<compile_context>
chip_gen: v7x
topology: tpu7x:2x2x1
jax: 0.10.0
libtpu: 0.0.40
codegen_flags: <defaults>
</compile_context>

<pallas_src>
import functools
import math

import jax
import jax.numpy as jnp
from jax.experimental import pallas as pl
from jax.experimental.pallas import tpu as pltpu

_VMEM_BLOCK_BUDGET = 20 * 1024 * 1024   # target for double-buffered input+output blocks
_VMEM_LIMIT_BYTES = 32 * 1024 * 1024    # raise v5e's 16 MiB scoped default; fits v7x


def _crop_concat_kernel(t_ref, g_ref, o_ref, *, cb1, delta, hc, wc):
    # t_ref: (1, Cblk, H1, W1) contracting-path block (cropped here)
    # g_ref: (1, Cblk, H2, W2) expanding-path block (straight copy)
    # o_ref: (1, Cblk, Hc, Wc) output channel block
    c = pl.program_id(1)

    @pl.when(c < cb1)
    def _():
        # centered crop, identical index math to crop_tensor():
        # tensor[:, :, delta:h1-delta, delta:h1-delta]
        o_ref[...] = t_ref[:, :, delta:delta + hc, delta:delta + wc]

    @pl.when(c >= cb1)
    def _():
        o_ref[...] = g_ref[...]


def _pick_channel_block(c1, c2, bytes_per_channel):
    """Largest divisor of gcd(c1, c2) whose double-buffered blocks fit the budget."""
    g = math.gcd(c1, c2)
    best = 1
    for d in range(1, g + 1):
        if g % d == 0 and 2 * d * bytes_per_channel <= _VMEM_BLOCK_BUDGET:
            best = d
    return best


def crop_and_conc(tensor, target_tensor):
    """Pallas equivalent of CropAndConc.forward(tensor, target_tensor)."""
    n, c1, h1, w1 = tensor.shape
    n2, c2, h2, w2 = target_tensor.shape
    assert n == n2, "batch dims must match"
    assert tensor.dtype == target_tensor.dtype

    # Exact crop_tensor() semantics: delta derived from dim 2, used for BOTH H and W.
    delta = (h1 - h2) // 2
    crop_h = h1 - 2 * delta
    crop_w = min(w1, h1 - delta) - delta
    # torch.cat along dim=1 requires cropped spatial dims to equal the target's.
    assert (crop_h, crop_w) == (h2, w2), (
        f"cropped size {(crop_h, crop_w)} must equal target size {(h2, w2)}")

    itemsize = jnp.dtype(tensor.dtype).itemsize
    bytes_per_channel = itemsize * (h1 * w1 + 2 * h2 * w2)  # t + g + o blocks, 1 chan
    cblk = _pick_channel_block(c1, c2, bytes_per_channel)
    cb1 = c1 // cblk
    cb2 = c2 // cblk

    c_out = c1 + c2
    out_shape = jax.ShapeDtypeStruct((n, c_out, h2, w2), tensor.dtype)

    kernel = functools.partial(_crop_concat_kernel, cb1=cb1, delta=delta, hc=h2, wc=w2)

    return pl.pallas_call(
        kernel,
        out_shape=out_shape,
        grid_spec=pltpu.PrefetchScalarGridSpec(
            num_scalar_prefetch=0,
            grid=(n, cb1 + cb2),
            in_specs=[
                # Contracting-path tensor: active only for c < cb1. For c >= cb1 the
                # index is clamped to the last region-1 block, so the pipeline does
                # not issue any new DMA for it.
                pl.BlockSpec((1, cblk, h1, w1),
                             lambda b, c: (b, jnp.minimum(c, cb1 - 1), 0, 0)),
                # Expanding-path target: active only for c >= cb1; clamped to block 0
                # during region 1 (that same block is the first one used in region 2,
                # so the early fetch is not wasted).
                pl.BlockSpec((1, cblk, h2, w2),
                             lambda b, c: (b, jnp.maximum(c - cb1, 0), 0, 0)),
            ],
            out_specs=pl.BlockSpec((1, cblk, h2, w2), lambda b, c: (b, c, 0, 0)),
        ),
        compiler_params=pltpu.CompilerParams(
            dimension_semantics=("parallel", "parallel"),
            vmem_limit_bytes=_VMEM_LIMIT_BYTES),
    )(tensor, target_tensor)


def _reference(tensor, target_tensor):
    # Mirrors PyTorch crop_tensor(): W is sliced with the H-derived bounds.
    h1 = tensor.shape[2]
    h2 = target_tensor.shape[2]
    delta = (h1 - h2) // 2
    cropped = tensor[:, :, delta:h1 - delta, delta:h1 - delta]
    return jnp.concatenate([cropped, target_tensor], axis=1)


def _check(tensor, target):
    out = jax.block_until_ready(crop_and_conc(tensor, target))
    ref = _reference(tensor, target)
    assert out.shape == ref.shape, (out.shape, ref.shape)
    assert out.dtype == ref.dtype
    assert bool(jnp.all(out == ref)), "mismatch vs pure-JAX reference"


if __name__ == "__main__":
    key = jax.random.PRNGKey(0)
    k1, k2, k3, k4 = jax.random.split(key, 4)

    # contracting-path feature (larger spatial) and expanding-path feature
    tensor = jax.random.normal(k1, (2, 4, 16, 16), dtype=jnp.float32)
    target = jax.random.normal(k2, (2, 4, 8, 8), dtype=jnp.float32)
    _check(tensor, target)

    # second shape: unequal channel counts, multi-block channel regions
    tensor2 = jax.random.normal(k3, (1, 6, 12, 12), dtype=jnp.float32)
    target2 = jax.random.normal(k4, (1, 4, 8, 8), dtype=jnp.float32)
    _check(tensor2, target2)

    print("KERNEL_OK")
</pallas_src>

<mosaic_0001>
module attributes {stable_mosaic.version = 11 : i64} {
  func.func @_crop_concat_kernel(%arg0: i32, %arg1: i32, %arg2: memref<1x4x16x16xf32, #tpu.memory_space<vmem>>, %arg3: memref<1x4x8x8xf32, #tpu.memory_space<vmem>>, %arg4: memref<1x4x8x8xf32, #tpu.memory_space<vmem>>) attributes {dimension_semantics = [#tpu.dimension_semantics<parallel>, #tpu.dimension_semantics<parallel>], iteration_bounds = array<i64: 2, 2>, scalar_prefetch = 0 : i64, scratch_operands = 0 : i64, tpu.core_type = #tpu.core_type<tc>, window_params = [{transform_indices = @transform_0, window_bounds = array<i64: 1, 4, 16, 16>}, {transform_indices = @transform_1, window_bounds = array<i64: 1, 4, 8, 8>}, {transform_indices = @transform_2, window_bounds = array<i64: 1, 4, 8, 8>}]} {
    %c1_i32 = arith.constant 1 : i32
    %0 = arith.cmpi slt, %arg1, %c1_i32 : i32
    %1 = arith.extui %0 : i1 to i32
    %c0_i32 = arith.constant 0 : i32
    %2 = arith.cmpi ne, %1, %c0_i32 : i32
    scf.if %2 {
      %c0 = arith.constant 0 : index
      %c0_2 = arith.constant 0 : index
      %c4 = arith.constant 4 : index
      %c4_3 = arith.constant 4 : index
      %6 = vector.load %arg2[%c0, %c0_2, %c4, %c4_3] : memref<1x4x16x16xf32, #tpu.memory_space<vmem>>, vector<1x4x8x8xf32>
      %c0_4 = arith.constant 0 : index
      %c0_5 = arith.constant 0 : index
      %c0_6 = arith.constant 0 : index
      %c0_7 = arith.constant 0 : index
      %7 = vector.load %arg4[%c0_4, %c0_5, %c0_6, %c0_7] : memref<1x4x8x8xf32, #tpu.memory_space<vmem>>, vector<1x4x8x8xf32>
      tpu.vector_store %arg4[%c0_4, %c0_5, %c0_6, %c0_7], %6 {strides = array<i32>} : memref<1x4x8x8xf32, #tpu.memory_space<vmem>>, vector<1x4x8x8xf32>,
    } else {
    }
    %c1_i32_0 = arith.constant 1 : i32
    %3 = arith.cmpi sge, %arg1, %c1_i32_0 : i32
    %4 = arith.extui %3 : i1 to i32
    %c0_i32_1 = arith.constant 0 : i32
    %5 = arith.cmpi ne, %4, %c0_i32_1 : i32
    scf.if %5 {
      %c0 = arith.constant 0 : index
      %c0_2 = arith.constant 0 : index
      %c0_3 = arith.constant 0 : index
      %c0_4 = arith.constant 0 : index
      %6 = vector.load %arg3[%c0, %c0_2, %c0_3, %c0_4] : memref<1x4x8x8xf32, #tpu.memory_space<vmem>>, vector<1x4x8x8xf32>
      %c0_5 = arith.constant 0 : index
      %c0_6 = arith.constant 0 : index
      %c0_7 = arith.constant 0 : index
      %c0_8 = arith.constant 0 : index
      %7 = vector.load %arg4[%c0_5, %c0_6, %c0_7, %c0_8] : memref<1x4x8x8xf32, #tpu.memory_space<vmem>>, vector<1x4x8x8xf32>
      tpu.vector_store %arg4[%c0_5, %c0_6, %c0_7, %c0_8], %6 {strides = array<i32>} : memref<1x4x8x8xf32, #tpu.memory_space<vmem>>, vector<1x4x8x8xf32>,
    } else {
    }
    return
  }
  func.func @transform_0(%arg0: i32, %arg1: i32) -> (i32, i32, i32, i32) {
    %c0_i32 = arith.constant 0 : i32
    %0 = arith.minsi %arg1, %c0_i32 : i32
    %c0_i32_0 = arith.constant 0 : i32
    %c0_i32_1 = arith.constant 0 : i32
    %c0_i32_2 = arith.constant 0 : i32
    return %arg0, %0, %c0_i32_0, %c0_i32_1 : i32, i32, i32, i32
  }
  func.func @transform_1(%arg0: i32, %arg1: i32) -> (i32, i32, i32, i32) {
    %c1_i32 = arith.constant 1 : i32
    %0 = arith.subi %arg1, %c1_i32 : i32
    %c0_i32 = arith.constant 0 : i32
    %1 = arith.maxsi %0, %c0_i32 : i32
    %c0_i32_0 = arith.constant 0 : i32
    %c0_i32_1 = arith.constant 0 : i32
    %c0_i32_2 = arith.constant 0 : i32
    return %arg0, %1, %c0_i32_0, %c0_i32_1 : i32, i32, i32, i32
  }
  func.func @transform_2(%arg0: i32, %arg1: i32) -> (i32, i32, i32, i32) {
    %c0_i32 = arith.constant 0 : i32
    %c0_i32_0 = arith.constant 0 : i32
    %c0_i32_1 = arith.constant 0 : i32
    return %arg0, %arg1, %c0_i32, %c0_i32_0 : i32, i32, i32, i32
  }
}

</mosaic_0001>

<llo_original>
// kernel: tpu_custom_call.1
$region0: #{tpu_custom_call.1}
  #allocation0 [shape = 'u32[]', space=smem, size = 0x4, offset = 0x4, fixed_abs, tag = 'smem constant byte address 0x4 - core index']
  #allocation1 [shape = 'u32[144,128]{1,0:T(1,128)}', space=vmem, size = 0x12000, scoped, tag = 'internal scratch']
  %s0 = inlined_call_operand.hbm [shape: f32[2,4,16,16], index: 0, kind: input, shape index: {}]
  %s1 = inlined_call_operand.hbm [shape: f32[2,4,8,8], index: 1, kind: input, shape index: {}]
  %s2 = inlined_call_operand.hbm [shape: f32[2,8,8,8], index: 2, kind: output, shape index: {}]
  %s3 = sld [smem:[#allocation0]]
  $region57: #{tpu_custom_call.1} parent=0
    _
  %s5 = ssub.s32 1, %s3
  %s6 = scalar_select 0, %s5, %s3
  $region1: #{tpu_custom_call.1} parent=0
    #allocation2 [shape = 'u8[65536]{0}', space=vmem, size = 0x10000, scoped, tag = 'input window, operand 0']
    #allocation3 [shape = 's32[2]{0}', space=sflag, size = 0x8, scoped, tag = 'scoped memory for tpu_custom_call.1']
    #allocation4 [shape = 's32[2]{0}', space=sflag, size = 0x8, scoped, tag = 'scoped memory for tpu_custom_call.1']
    #allocation5 [shape = 'u8[32768]{0}', space=vmem, size = 0x8000, scoped, tag = 'input window, operand 1']
    #allocation6 [shape = 's32[2]{0}', space=sflag, size = 0x8, scoped, tag = 'scoped memory for tpu_custom_call.1']
    #allocation7 [shape = 'u8[32768]{0}', space=vmem, size = 0x8000, scoped, tag = 'output window, operand 0']
    %7 = vsyncpa [#allocation3], 0
    %s8 = scalar_lea.sflag [#allocation3], 1
    %9 = vsyncpa %s8, 0
    %10 = vsyncpa [#allocation6], 0
    %s11 = scalar_lea.sflag [#allocation6], 1
    %12 = vsyncpa %s11, 0
    %13 = vsyncpa [#allocation4], 0
    %s14 = scalar_lea.sflag [#allocation4], 1
    %15 = vsyncpa %s14, 0
    loop: start=0, step=1, limit=6
    $region2: #{tpu_custom_call.1} parent=1 // loop_pre_header
      _
    $region3: #{tpu_custom_call.1} parent=1 // loop_header
      %s17 = sphi 0, %s21
      %p18 = scmp.ge.s32.totalorder %s17, 6
      %s24 = sphi 0, %s36
      %s25 = sphi 0, %s32
      %s26 = sphi 0, %s24
      %s27 = sphi 0, %s25
      %s28 = sphi 0, %s26
      %s29 = sphi 0, %s27
      %s45 = sphi 0, %s47
      %s48 = sphi 0, %s45
      %s49 = sphi 0, %s48
      %s65 = sphi 0, %s49
      %s79 = sphi 0, %s81
      %s82 = sphi 0, %s79
      %s83 = sphi 0, %s82
      %s99 = sphi 0, %s83
      %s107 = sphi 0, %s109
      %s110 = sphi 0, %s107
      %s111 = sphi 0, %s110
      %s127 = sphi 0, %s111
    $region4: #{tpu_custom_call.1} parent=1 // loop_header_branch
      %20 = sbr.rel (%p18) target = $region8
    $region5: #{tpu_custom_call.1} parent=1 // loop_body
      %s22 = ssub.s32 %s17, 1
      %s23 = ssub.s32 %s17, 2
      %s30 = sadd.s32 1, %s25
      %p31 = scmp.ge.s32.totalorder %s30, 2
      %s32 = scalar_select %p31, 0, %s30
      %s33 = sadd.s32 1, %s24
      %s34 = scalar_select %p31, %s33, %s24
      %p35 = scmp.ge.s32.totalorder %s34, 2
      %s36 = scalar_select %p35, 0, %s34
      %p37 = scmp.lt.s32.totalorder %s25, 0
      %s38 = scalar_select %p37, %s25, 0
      %p39 = scmp.lt.s32.totalorder %s32, 0
      %s40 = scalar_select %p39, %s32, 0
      %s41 = ssub.s32 %s24, %s36
      %s42 = ssub.s32 %s38, %s40
      %s43 = sor.u32 %s41, %s42
      %p44 = scmp.eq.s32.totalorder %s43, 0
      %s46 = sadd.s32 %s45, 1
      %s47 = scalar_select %p44, %s45, %s46
      %p50 = pneg %p44
      %p51 = scmp.eq.s32.totalorder %s17, 3
      %p52 = por %p50, %p51
      %p53 = scmp.ne.s32.totalorder %s45, %s48
      %p54 = scmp.eq.s32.totalorder %s17, 0
      %p55 = por %p53, %p54
      %p56 = scmp.ne.s32.totalorder %s45, %s48
      %p57 = scmp.eq.s32.totalorder %s22, 3
      %p58 = por %p56, %p57
      %p59 = scmp.ne.s32.totalorder %s48, %s49
      %p60 = scmp.eq.s32.totalorder %s22, 0
      %p61 = por %p59, %p60
      %p62 = scmp.ne.s32.totalorder %s48, %s49
      %p63 = scmp.eq.s32.totalorder %s23, 3
      %p64 = por %p62, %p63
      %p66 = scmp.ne.s32.totalorder %s49, %s65
      %p67 = scmp.eq.s32.totalorder %s23, 0
      %p68 = por %p66, %p67
      %s69 = ssub.s32 %s25, 1
      %p70 = scmp.gt.s32.totalorder %s69, 0
      %s71 = scalar_select %p70, %s69, 0
      %s72 = ssub.s32 %s32, 1
      %p73 = scmp.gt.s32.totalorder %s72, 0
      %s74 = scalar_select %p73, %s72, 0
      %s75 = ssub.s32 %s24, %s36
      %s76 = ssub.s32 %s71, %s74
      %s77 = sor.u32 %s75, %s76
      %p78 = scmp.eq.s32.totalorder %s77, 0
      %s80 = sadd.s32 %s79, 1
      %s81 = scalar_select %p78, %s79, %s80
      %p84 = pneg %p78
      %p85 = scmp.eq.s32.totalorder %s17, 3
      %p86 = por %p84, %p85
      %p87 = scmp.ne.s32.totalorder %s79, %s82
      %p88 = scmp.eq.s32.totalorder %s17, 0
      %p89 = por %p87, %p88
      %p90 = scmp.ne.s32.totalorder %s79, %s82
      %p91 = scmp.eq.s32.totalorder %s22, 3
      %p92 = por %p90, %p91
      %p93 = scmp.ne.s32.totalorder %s82, %s83
      %p94 = scmp.eq.s32.totalorder %s22, 0
      %p95 = por %p93, %p94
      %p96 = scmp.ne.s32.totalorder %s82, %s83
      %p97 = scmp.eq.s32.totalorder %s23, 3
      %p98 = por %p96, %p97
      %p100 = scmp.ne.s32.totalorder %s83, %s99
      %p101 = scmp.eq.s32.totalorder %s23, 0
      %p102 = por %p100, %p101
      %s103 = ssub.s32 %s24, %s36
      %s104 = ssub.s32 %s25, %s32
      %s105 = sor.u32 %s103, %s104
      %p106 = scmp.eq.s32.totalorder %s105, 0
      %s108 = sadd.s32 %s107, 1
      %s109 = scalar_select %p106, %s107, %s108
      %p112 = pneg %p106
      %p113 = scmp.eq.s32.totalorder %s17, 3
      %p114 = por %p112, %p113
      %p115 = scmp.ne.s32.totalorder %s107, %s110
      %p116 = scmp.eq.s32.totalorder %s17, 0
      %p117 = por %p115, %p116
      %p118 = scmp.ne.s32.totalorder %s107, %s110
      %p119 = scmp.eq.s32.totalorder %s22, 3
      %p120 = por %p118, %p119
      %p121 = scmp.ne.s32.totalorder %s110, %s111
      %p122 = scmp.eq.s32.totalorder %s22, 0
      %p123 = por %p121, %p122
      %p124 = scmp.ne.s32.totalorder %s110, %s111
      %p125 = scmp.eq.s32.totalorder %s23, 3
      %p126 = por %p124, %p125
      %p128 = scmp.ne.s32.totalorder %s111, %s127
      %p129 = scmp.eq.s32.totalorder %s23, 0
      %p130 = por %p128, %p129
      %p131 = scmp.le.s32.totalorder 1, %s17
      %p132 = scmp.lt.s32.totalorder %s17, 5
      %p133 = pnand %p131, %p132
      %p134 = pneg %p133
      // Predicated region
      $region9: #{tpu_custom_call.1} parent=5 // pred_check
        _
      $region10: #{tpu_custom_call.1} parent=5 // pred_check_branch
        %136 = sbr.rel (%p133) target = $region12
      $region11: #{tpu_custom_call.1} parent=5 // pred_region
        %s137 = ssub.s32 %s17, 1
      $region12: #{tpu_custom_call.1} parent=5 // pred_fallthru
        _
      %p138 = scmp.lt.s32.totalorder %s17, 4
      // Predicated region
      $region13: #{tpu_custom_call.1} parent=5 // pred_check
        %p139 = pneg %p138
      $region14: #{tpu_custom_call.1} parent=5 // pred_check_branch
        %141 = sbr.rel (%p139) target = $region16
      $region15: #{tpu_custom_call.1} parent=5 // pred_region
        // Predicated region
        $region17: #{tpu_custom_call.1} parent=15 // pred_check
          %p142 = pneg %p55
        $region18: #{tpu_custom_call.1} parent=15 // pred_check_branch
          %144 = sbr.rel (%p142) target = $region20
        $region19: #{tpu_custom_call.1} parent=15 // pred_region
          %s145 = sand.u32 %s45, 1
          %s146 = scalar_lea.sflag [#allocation3], %s145
          %s147 = sand.u32 %s45, 1
          %s148 = smul.addr %s147, 64
          %s149 = scalar_lea.vmem [#allocation2], %s148
          %p150 = scmp.lt.s32.totalorder %s25, 0
          %s151 = scalar_select %p150, %s25, 0
          %s152 = smul.u32 4, %s151
          %s154 = ssub.s32 1024, 1024
          %155 = vsyncadd %s146, %s154
          %s156 = smul.addr %s152, 2
          %s157 = smul.addr %s24, 8
          %s158 = sadd.s32 %s156, %s157
          %s159 = smul.addr %s158, 128
          %s160 = scalar_lea.hbm %s0, %s159
          %s161 = sshll.u32 %s149, 4
          %s162 = int_to_ptr.vmem [resolvable:$true] %s161
          %167 = dma.hbm_to_vmem [thread:$0]  %s160, 1024, %s162, %s146, 128, 128, 8
        $region20: #{tpu_custom_call.1} parent=15 // pred_fallthru
          _
        // Predicated region
        $region21: #{tpu_custom_call.1} parent=15 // pred_check
          %p168 = pneg %p89
        $region22: #{tpu_custom_call.1} parent=15 // pred_check_branch
          %170 = sbr.rel (%p168) target = $region24
        $region23: #{tpu_custom_call.1} parent=15 // pred_region
          %s171 = sand.u32 %s79, 1
          %s172 = scalar_lea.sflag [#allocation6], %s171
          %s173 = sand.u32 %s79, 1
          %s174 = smul.addr %s173, 32
          %s175 = scalar_lea.vmem [#allocation5], %s174
          %s176 = ssub.s32 %s25, 1
          %p177 = scmp.gt.s32.totalorder %s176, 0
          %s178 = scalar_select %p177, %s176, 0
          %s179 = smul.u32 4, %s178
          %s181 = ssub.s32 512, 512
          %182 = vsyncadd %s172, %s181
          %s183 = smul.addr %s24, 4
          %s184 = sadd.s32 %s179, %s183
          %s185 = smul.addr %s184, 128
          %s186 = scalar_lea.hbm %s1, %s185
          %s187 = sshll.u32 %s175, 4
          %s188 = int_to_ptr.vmem [resolvable:$true] %s187
          %193 = dma.hbm_to_vmem [thread:$0]  %s186, 512, %s188, %s172, 128, 128, 8
        $region24: #{tpu_custom_call.1} parent=15 // pred_fallthru
          _
      $region16: #{tpu_custom_call.1} parent=5 // pred_fallthru
        _
      %p194 = scmp.le.s32.totalorder 1, %s17
      %p195 = scmp.lt.s32.totalorder %s17, 5
      %p196 = pnand %p194, %p195
      %p197 = pneg %p196
      // Predicated region
      $region25: #{tpu_custom_call.1} parent=5 // pred_check
        _
      $region26: #{tpu_custom_call.1} parent=5 // pred_check_branch
        %199 = sbr.rel (%p196) target = $region28
      $region27: #{tpu_custom_call.1} parent=5 // pred_region
        %s200 = ssub.s32 %s17, 1
        %s201 = sand.u32 %s48, 1
        %s202 = scalar_lea.sflag [#allocation3], %s201
        %s203 = sand.u32 %s48, 1
        %s204 = smul.addr %s203, 64
        %s205 = scalar_lea.vmem [#allocation2], %s204
        // Predicated region
        $region29: #{tpu_custom_call.1} parent=27 // pred_check
          %p206 = pneg %p61
        $region30: #{tpu_custom_call.1} parent=27 // pred_check_branch
          %208 = sbr.rel (%p206) target = $region32
        $region31: #{tpu_custom_call.1} parent=27 // pred_region
          %209 = dma.done %s202, 1024
        $region32: #{tpu_custom_call.1} parent=27 // pred_fallthru
          _
        %s210 = sand.u32 %s82, 1
        %s211 = scalar_lea.sflag [#allocation6], %s210
        %s212 = sand.u32 %s82, 1
        %s213 = smul.addr %s212, 32
        %s214 = scalar_lea.vmem [#allocation5], %s213
        // Predicated region
        $region33: #{tpu_custom_call.1} parent=27 // pred_check
          %p215 = pneg %p95
        $region34: #{tpu_custom_call.1} parent=27 // pred_check_branch
          %217 = sbr.rel (%p215) target = $region36
        $region35: #{tpu_custom_call.1} parent=27 // pred_region
          %218 = dma.done %s211, 512
        $region36: #{tpu_custom_call.1} parent=27 // pred_fallthru
          _
        %s219 = sand.u32 %s48, 1
        %s220 = scalar_lea.sflag [#allocation3], %s219
        %s221 = sand.u32 %s48, 1
        %s222 = smul.addr %s221, 64
        %s223 = scalar_lea.vmem [#allocation2], %s222
        %p224 = pneg %p61
        %p225 = pneg %p58
        %s226 = sand.u32 %s82, 1
        %s227 = scalar_lea.sflag [#allocation6], %s226
        %s228 = sand.u32 %s82, 1
        %s229 = smul.addr %s228, 32
        %s230 = scalar_lea.vmem [#allocation5], %s229
        %p231 = pneg %p95
        %p232 = pneg %p92
        %p233 = pneg %p123
        %p234 = pneg %p120
        %s235 = sand.u32 %s110, 1
        %s236 = scalar_lea.sflag [#allocation4], %s235
        %s237 = sand.u32 %s110, 1
        %s238 = smul.addr %s237, 32
        %s239 = scalar_lea.vmem [#allocation7], %s238
        %p240 = scmp.lt.s32.totalorder %s27, 0
        %s241 = scalar_select %p240, %s27, 0
        %s242 = smul.u32 4, %s241
        %s243 = ssub.s32 %s27, 1
        %p244 = scmp.gt.s32.totalorder %s243, 0
        %s245 = scalar_select %p244, %s243, 0
        %s246 = smul.u32 4, %s245
        %s247 = smul.u32 4, %s27
        %p248 = scmp.lt.s32.totalorder %s27, 1
        // Predicated region
        $region37: #{tpu_custom_call.1} parent=27 // pred_check
          %p249 = pneg %p248
        $region38: #{tpu_custom_call.1} parent=27 // pred_check_branch
          %251 = sbr.rel (%p249) target = $region40
        $region39: #{tpu_custom_call.1} parent=27 // pred_region
          %v252 = vld [vmem:[%s205 + $0x4] sm:$0xff]
          %v253 = vld [vmem:[%s205 + $0x14] sm:$0xff]
          %v254 = vld [vmem:[%s205 + $0x24] sm:$0xff]
          %v255 = vld [vmem:[%s205 + $0x34] sm:$0xff]
          %260 = vrot.lane.b32.xlu0 %v252, 124
          %v261 = vpop.permute.xlu0 %260
          %262 = vrot.lane.b32.xlu0 %v253, 124
          %v263 = vpop.permute.xlu0 %262
          %264 = vrot.lane.b32.xlu0 %v254, 124
          %v265 = vpop.permute.xlu0 %264
          %266 = vrot.lane.b32.xlu0 %v255, 124
          %v267 = vpop.permute.xlu0 %266
          %vm272 = vcmask 64512
          %273 = vst.msk [vmem:[%s239] sm:$0xff] %vm272, %v261
          %274 = vst.msk [vmem:[%s239 + $0x8] sm:$0xff] %vm272, %v263
          %275 = vst.msk [vmem:[%s239 + $0x10] sm:$0xff] %vm272, %v265
          %276 = vst.msk [vmem:[%s239 + $0x18] sm:$0xff] %vm272, %v267
        $region40: #{tpu_custom_call.1} parent=27 // pred_fallthru
          _
        %p277 = scmp.ge.s32.totalorder %s27, 1
        // Predicated region
        $region41: #{tpu_custom_call.1} parent=27 // pred_check
          %p278 = pneg %p277
        $region42: #{tpu_custom_call.1} parent=27 // pred_check_branch
          %280 = sbr.rel (%p278) target = $region44
        $region43: #{tpu_custom_call.1} parent=27 // pred_region
          %v281 = vld [vmem:[%s214] sm:$0xff]
          %v282 = vld [vmem:[%s214 + $0x8] sm:$0xff]
          %v283 = vld [vmem:[%s214 + $0x10] sm:$0xff]
          %v284 = vld [vmem:[%s214 + $0x18] sm:$0xff]
          %vm285 = vcmask 64512
          %286 = vst.msk [vmem:[%s239] sm:$0xff] %vm285, %v281
          %287 = vst.msk [vmem:[%s239 + $0x8] sm:$0xff] %vm285, %v282
          %288 = vst.msk [vmem:[%s239 + $0x10] sm:$0xff] %vm285, %v283
          %289 = vst.msk [vmem:[%s239 + $0x18] sm:$0xff] %vm285, %v284
        $region44: #{tpu_custom_call.1} parent=27 // pred_fallthru
          _
        %s290 = sand.u32 %s110, 1
        %s291 = scalar_lea.sflag [#allocation4], %s290
        %s292 = sand.u32 %s110, 1
        %s293 = smul.addr %s292, 32
        %s294 = scalar_lea.vmem [#allocation7], %s293
        // Predicated region
        $region45: #{tpu_custom_call.1} parent=27 // pred_check
          %p295 = pneg %p120
        $region46: #{tpu_custom_call.1} parent=27 // pred_check_branch
          %297 = sbr.rel (%p295) target = $region48
        $region47: #{tpu_custom_call.1} parent=27 // pred_region
          %s298 = smul.u32 4, %s27
          %s300 = ssub.s32 512, 512
          %301 = vsyncadd %s291, %s300
          %s302 = smul.addr %s26, 8
          %s303 = sadd.s32 %s298, %s302
          %s304 = smul.addr %s303, 128
          %s305 = scalar_lea.hbm %s2, %s304
          %s306 = sshll.u32 %s294, 4
          %s307 = int_to_ptr.vmem [resolvable:$true] %s306
          %312 = dma.vmem_to_hbm [thread:$0]  %s307, 512, %s305, %s291, 128, 128, 8
        $region48: #{tpu_custom_call.1} parent=27 // pred_fallthru
          _
      $region28: #{tpu_custom_call.1} parent=5 // pred_fallthru
        _
      %p313 = scmp.le.s32.totalorder 2, %s17
      // Predicated region
      $region49: #{tpu_custom_call.1} parent=5 // pred_check
        %p314 = pneg %p313
      $region50: #{tpu_custom_call.1} parent=5 // pred_check_branch
        %316 = sbr.rel (%p314) target = $region52
      $region51: #{tpu_custom_call.1} parent=5 // pred_region
        %s317 = ssub.s32 %s17, 2
        // Predicated region
        $region53: #{tpu_custom_call.1} parent=51 // pred_check
          %p318 = pneg %p126
        $region54: #{tpu_custom_call.1} parent=51 // pred_check_branch
          %320 = sbr.rel (%p318) target = $region56
        $region55: #{tpu_custom_call.1} parent=51 // pred_region
          %s321 = sand.u32 %s111, 1
          %s322 = scalar_lea.sflag [#allocation4], %s321
          %s323 = sand.u32 %s111, 1
          %s324 = smul.addr %s323, 32
          %s325 = scalar_lea.vmem [#allocation7], %s324
          %326 = dma.done %s322, 512
        $region56: #{tpu_custom_call.1} parent=51 // pred_fallthru
          _
      $region52: #{tpu_custom_call.1} parent=5 // pred_fallthru
        _
    $region6: #{tpu_custom_call.1} parent=1 // loop_footer
      %s21 = sadd.s32 1, %s17
    $region7: #{tpu_custom_call.1} parent=1 // loop_footer_branch
      %16 = sbr.rel target = $region3
    $region8: #{tpu_custom_call.1} parent=1 // loop_exit
      _
    %327 = vsyncpa [#allocation3], 1
    %s328 = scalar_lea.sflag [#allocation3], 1
    %329 = vsyncpa %s328, 1
    %330 = vsyncpa [#allocation6], 1
    %s331 = scalar_lea.sflag [#allocation6], 1
    %332 = vsyncpa %s331, 1
    %333 = vsyncpa [#allocation4], 1
    %s334 = scalar_lea.sflag [#allocation4], 1
    %335 = vsyncpa %s334, 1

</llo_original>
